<compile_context>
chip_gen: v6e
topology: v6e:2x2x1
jax: 0.10.0
libtpu: 0.0.40
codegen_flags: <defaults>
</compile_context>

<pallas_src>
import functools

import numpy as np
import jax
import jax.numpy as jnp
from jax import lax
from jax.experimental import pallas as pl
from jax.experimental.pallas import tpu as pltpu


def _pick_tile(n, prefs=(256, 128)):
    """Largest preferred tile that divides n; otherwise use the full extent."""
    for p in prefs:
        if n >= p and n % p == 0:
            return p
    return n


# ---------------------------------------------------------------------------
# Pass 1: fused QKV projection   qkv = x @ [Wq*scale | Wk | Wv]
# ---------------------------------------------------------------------------
def qkv_proj_kernel(x_ref, w_ref, o_ref, acc_ref):
    @pl.when(pl.program_id(1) == 0)
    def _():
        acc_ref[...] = jnp.zeros_like(acc_ref)

    acc_ref[...] += jnp.dot(x_ref[...], w_ref[...],
                            preferred_element_type=jnp.float32)

    @pl.when(pl.program_id(1) == pl.num_programs(1) - 1)
    def _():
        o_ref[...] = acc_ref[...].astype(o_ref.dtype)


def _qkv_projection(x2d, wqkv):
    rows, d_in = x2d.shape
    n3 = wqkv.shape[1]
    tm = _pick_tile(rows, (512, 256, 128))
    tk = _pick_tile(d_in, (512, 256, 128))
    return pl.pallas_call(
        qkv_proj_kernel,
        out_shape=jax.ShapeDtypeStruct((rows, n3), x2d.dtype),
        grid_spec=pltpu.PrefetchScalarGridSpec(
            num_scalar_prefetch=0,
            grid=(rows // tm, d_in // tk),
            in_specs=[
                pl.BlockSpec((tm, tk), lambda r, k: (r, k)),
                pl.BlockSpec((tk, n3), lambda r, k: (k, 0)),
            ],
            out_specs=pl.BlockSpec((tm, n3), lambda r, k: (r, 0)),
            scratch_shapes=[pltpu.VMEM((tm, n3), jnp.float32)],
        ),
        compiler_params=pltpu.CompilerParams(
            dimension_semantics=("parallel", "arbitrary")),
    )(x2d, wqkv)


# ---------------------------------------------------------------------------
# Pass 2: flash attention (online softmax) + fused output projection
# ---------------------------------------------------------------------------
def flash_attn_kernel(q_ref, k_ref, v_ref, wo_ref, bo_ref, o_ref,
                      m_sc, l_sc, acc_sc, out_sc, *, tq, tk, approx_recip):
    i = pl.program_id(1)    # query tile
    h = pl.program_id(2)    # head (reduction axis: out-proj accumulation)
    j = pl.program_id(3)    # kv tile (reduction axis: online softmax)
    nh = pl.num_programs(2)
    nkv = pl.num_programs(3)

    @pl.when(j == 0)
    def _():
        m_sc[...] = jnp.full(m_sc.shape, -jnp.inf, m_sc.dtype)
        l_sc[...] = jnp.zeros_like(l_sc)
        acc_sc[...] = jnp.zeros_like(acc_sc)

    @pl.when(jnp.logical_and(h == 0, j == 0))
    def _():
        out_sc[...] = jnp.zeros_like(out_sc)

    q_start = i * tq
    k_start = j * tk

    # Causal skip: a KV tile whose first key is past the last query row of this
    # query tile is fully masked -> skip all compute for it.
    @pl.when(k_start <= q_start + (tq - 1))
    def _():
        q = q_ref[0, 0]                 # (tq, hd)  (score scale folded into Wq)
        k = k_ref[0, 0]                 # (tk, hd)
        v = v_ref[0, 0]                 # (tk, hd)

        s = lax.dot_general(q, k, (((1,), (1,)), ((), ())),
                            preferred_element_type=jnp.float32)   # (tq, tk)

        # Per-tile causal mask (kv tile 0 is always processed first and has at
        # least one unmasked key per row, so -inf is NaN-safe here).
        row = q_start + lax.broadcasted_iota(jnp.int32, (tq, tk), 0)
        col = k_start + lax.broadcasted_iota(jnp.int32, (tq, tk), 1)
        s = jnp.where(col > row, -jnp.inf, s)

        m_prev = m_sc[...]
        m_new = jnp.maximum(m_prev, jnp.max(s, axis=-1, keepdims=True))
        alpha = jnp.exp(m_prev - m_new)
        p = jnp.exp(s - m_new)
        l_sc[...] = alpha * l_sc[...] + jnp.sum(p, axis=-1, keepdims=True)
        acc_sc[...] = alpha * acc_sc[...] + jnp.dot(
            p.astype(v.dtype), v, preferred_element_type=jnp.float32)
        m_sc[...] = m_new

    # Per-head finalize: out = concat_h(ctx_h) @ Wo == sum_h ctx_h @ Wo[h].
    @pl.when(j == nkv - 1)
    def _():
        inv_l = pl.reciprocal(l_sc[...], approx=approx_recip)
        ctx = acc_sc[...] * inv_l
        out_sc[...] += jnp.dot(ctx.astype(wo_ref.dtype), wo_ref[...],
                               preferred_element_type=jnp.float32)

    @pl.when(jnp.logical_and(h == nh - 1, j == nkv - 1))
    def _():
        o_ref[0] = (out_sc[...] + bo_ref[...]).astype(o_ref.dtype)


def multi_head_attention(x, wq, wk, wv, wo, bo, *, num_heads, compute_dtype=None):
    """x: (B, T, d_in); wq/wk/wv: (d_in, d_out) (nn.Linear weight, pre-transposed);
    wo: (d_out, d_out); bo: (1, d_out).  compute_dtype: optional MXU operand dtype
    (e.g. jnp.bfloat16 on v6e/v7x); accumulation & softmax stay f32."""
    B, T, d_in = x.shape
    d_out = wq.shape[1]
    H = num_heads
    assert d_out % H == 0, "d_out must be divisible by num_heads"
    hd = d_out // H
    assert hd % 8 == 0 or hd == d_out, "head_dim should be a multiple of 8"

    out_dtype = x.dtype
    cdt = compute_dtype if compute_dtype is not None else x.dtype
    approx_recip = bool(np.dtype(cdt) == np.dtype(jnp.bfloat16))

    # Fold 1/sqrt(head_dim) into W_query once (weight-sized; fuses with the concat).
    scale = 1.0 / (hd ** 0.5)
    wqkv = jnp.concatenate([wq * scale, wk, wv], axis=1).astype(cdt)

    # ---- Pass 1: fused QKV projection over flattened tokens ---------------
    qkv = _qkv_projection(x.reshape(B * T, d_in).astype(cdt), wqkv)

    # Layout plumbing (plain XLA): (B*T, 3*d_out) -> (3, B, H, T, hd)
    qkv = qkv.reshape(B, T, 3, H, hd).transpose(2, 0, 3, 1, 4)
    q, k, v = qkv[0], qkv[1], qkv[2]

    # ---- Pass 2: flash attention + fused out-projection --------------------
    tq = _pick_tile(T, (256, 128))
    tk = tq  # equal q/kv tiles keep the causal-diagonal handling simple

    kernel = functools.partial(flash_attn_kernel, tq=tq, tk=tk,
                               approx_recip=approx_recip)

    return pl.pallas_call(
        kernel,
        out_shape=jax.ShapeDtypeStruct((B, T, d_out), out_dtype),
        grid_spec=pltpu.PrefetchScalarGridSpec(
            num_scalar_prefetch=0,
            grid=(B, T // tq, H, T // tk),
            in_specs=[
                pl.BlockSpec((1, 1, tq, hd), lambda b, i, h, j: (b, h, i, 0)),  # Q tile
                pl.BlockSpec((1, 1, tk, hd), lambda b, i, h, j: (b, h, j, 0)),  # K tile
                pl.BlockSpec((1, 1, tk, hd), lambda b, i, h, j: (b, h, j, 0)),  # V tile
                pl.BlockSpec((hd, d_out),    lambda b, i, h, j: (h, 0)),        # Wo[h]
                pl.BlockSpec((1, d_out),     lambda b, i, h, j: (0, 0)),        # bias
            ],
            out_specs=pl.BlockSpec((1, tq, d_out), lambda b, i, h, j: (b, i, 0)),
            scratch_shapes=[
                pltpu.VMEM((tq, 1), jnp.float32),       # running row max
                pltpu.VMEM((tq, 1), jnp.float32),       # running softmax denom
                pltpu.VMEM((tq, hd), jnp.float32),      # per-head context accumulator
                pltpu.VMEM((tq, d_out), jnp.float32),   # out-projection accumulator
            ],
        ),
        compiler_params=pltpu.CompilerParams(
            dimension_semantics=("parallel", "parallel", "arbitrary", "arbitrary")),
        # NOTE: at production shapes raise vmem_limit_bytes here (<= ~56 MiB on v7x).
    )(q, k, v, wo.astype(cdt), bo.astype(jnp.float32))


# ---------------------------------------------------------------------------
# Pure-JAX reference mirroring the PyTorch forward (eval mode)
# ---------------------------------------------------------------------------
def reference_mha(x, wq, wk, wv, wo, bo, *, num_heads):
    B, T, d_in = x.shape
    d_out = wq.shape[1]
    hd = d_out // num_heads
    q = (x @ wq).reshape(B, T, num_heads, hd).transpose(0, 2, 1, 3)
    k = (x @ wk).reshape(B, T, num_heads, hd).transpose(0, 2, 1, 3)
    v = (x @ wv).reshape(B, T, num_heads, hd).transpose(0, 2, 1, 3)
    scores = jnp.einsum("bhqd,bhkd->bhqk", q, k)
    mask = jnp.triu(jnp.ones((T, T), bool), k=1)
    scores = jnp.where(mask, -jnp.inf, scores)
    w = jax.nn.softmax(scores / (hd ** 0.5), axis=-1)
    ctx = jnp.einsum("bhqk,bhkd->bhqd", w, v).transpose(0, 2, 1, 3).reshape(B, T, d_out)
    return ctx @ wo + bo


if __name__ == "__main__":
    def init(k, shape, fan_in):
        bound = 1.0 / (fan_in ** 0.5)
        return jax.random.uniform(k, shape, jnp.float32, -bound, bound)

    def run_case(case, B, T, d_in, d_out, num_heads, compute_dtype, atol, rtol):
        key = jax.random.fold_in(jax.random.PRNGKey(0), case)
        kx, kq, kk, kv, ko, kb = jax.random.split(key, 6)
        x = jax.random.normal(kx, (B, T, d_in), dtype=jnp.float32)
        wq = init(kq, (d_in, d_out), d_in)     # = W_query.weight.T
        wk = init(kk, (d_in, d_out), d_in)     # = W_key.weight.T
        wv = init(kv, (d_in, d_out), d_in)     # = W_value.weight.T
        wo = init(ko, (d_out, d_out), d_out)   # = out_proj.weight.T
        bo = init(kb, (1, d_out), d_out)       # = out_proj.bias

        out = multi_head_attention(x, wq, wk, wv, wo, bo,
                                   num_heads=num_heads, compute_dtype=compute_dtype)
        out = jax.block_until_ready(out)
        ref = reference_mha(x, wq, wk, wv, wo, bo, num_heads=num_heads)
        assert out.shape == (B, T, d_out)
        err = float(jnp.max(jnp.abs(out - ref)))
        assert jnp.allclose(out, ref, atol=atol, rtol=rtol), \
            f"case {case}: mismatch vs reference (max abs err {err:.3e})"

    # 1) Small shapes consistent with the module (f32 path, strict check).
    run_case(0, B=2, T=8, d_in=32, d_out=32, num_heads=4,
             compute_dtype=None, atol=1e-5, rtol=1e-5)
    # 2) Multi-tile path: exercises q/kv tiling, causal tile-skip, head reduction.
    run_case(1, B=2, T=256, d_in=64, d_out=128, num_heads=4,
             compute_dtype=None, atol=1e-4, rtol=1e-4)
    # 3) bf16 MXU operands (v6e/v7x fast path); accumulation & softmax stay f32.
    run_case(0, B=2, T=8, d_in=32, d_out=32, num_heads=4,
             compute_dtype=jnp.bfloat16, atol=5e-2, rtol=5e-2)

    print("KERNEL_OK")
</pallas_src>

<mosaic_0001>
module attributes {stable_mosaic.version = 11 : i64} {
  func.func @qkv_proj_kernel(%arg0: i32, %arg1: i32, %arg2: memref<16x32xf32, #tpu.memory_space<vmem>>, %arg3: memref<32x96xf32, #tpu.memory_space<vmem>>, %arg4: memref<16x96xf32, #tpu.memory_space<vmem>>, %arg5: memref<16x96xf32, #tpu.memory_space<vmem>>) attributes {dimension_semantics = [#tpu.dimension_semantics<parallel>, #tpu.dimension_semantics<arbitrary>], iteration_bounds = array<i64: 1, 1>, scalar_prefetch = 0 : i64, scratch_operands = 1 : i64, tpu.core_type = #tpu.core_type<tc>, window_params = [{transform_indices = @transform_0, window_bounds = array<i64: 16, 32>}, {transform_indices = @transform_1, window_bounds = array<i64: 32, 96>}, {transform_indices = @transform_2, window_bounds = array<i64: 16, 96>}]} {
    %c0_i32 = arith.constant 0 : i32
    %0 = arith.cmpi eq, %arg1, %c0_i32 : i32
    %1 = arith.extui %0 : i1 to i32
    %c0_i32_0 = arith.constant 0 : i32
    %2 = arith.cmpi ne, %1, %c0_i32_0 : i32
    scf.if %2 {
      %cst_10 = arith.constant 0.000000e+00 : f32
      %12 = vector.broadcast %cst_10 : f32 to vector<16x96xf32>
      %c0_11 = arith.constant 0 : index
      %c0_12 = arith.constant 0 : index
      %13 = vector.load %arg5[%c0_11, %c0_12] : memref<16x96xf32, #tpu.memory_space<vmem>>, vector<16x96xf32>
      tpu.vector_store %arg5[%c0_11, %c0_12], %12 {strides = array<i32>} : memref<16x96xf32, #tpu.memory_space<vmem>>, vector<16x96xf32>,
    } else {
    }
    %c0 = arith.constant 0 : index
    %c0_1 = arith.constant 0 : index
    %3 = vector.load %arg5[%c0, %c0_1] : memref<16x96xf32, #tpu.memory_space<vmem>>, vector<16x96xf32>
    %c0_2 = arith.constant 0 : index
    %c0_3 = arith.constant 0 : index
    %4 = vector.load %arg2[%c0_2, %c0_3] : memref<16x32xf32, #tpu.memory_space<vmem>>, vector<16x32xf32>
    %c0_4 = arith.constant 0 : index
    %c0_5 = arith.constant 0 : index
    %5 = vector.load %arg3[%c0_4, %c0_5] : memref<32x96xf32, #tpu.memory_space<vmem>>, vector<32x96xf32>
    %cst = arith.constant dense<0.000000e+00> : vector<16x96xf32>
    %6 = tpu.matmul %4, %5, %cst {dimension_numbers = #tpu.dot_dimension_numbers<[1], [0], [0], [1], [0, 0, 1, 1], [], []>} : vector<16x32xf32>, vector<32x96xf32>, vector<16x96xf32> -> vector<16x96xf32>
    %7 = arith.addf %3, %6 : vector<16x96xf32>
    %c0_6 = arith.constant 0 : index
    %c0_7 = arith.constant 0 : index
    %8 = vector.load %arg5[%c0_6, %c0_7] : memref<16x96xf32, #tpu.memory_space<vmem>>, vector<16x96xf32>
    tpu.vector_store %arg5[%c0_6, %c0_7], %7 {strides = array<i32>} : memref<16x96xf32, #tpu.memory_space<vmem>>, vector<16x96xf32>,
    %c0_i32_8 = arith.constant 0 : i32
    %9 = arith.cmpi eq, %arg1, %c0_i32_8 : i32
    %10 = arith.extui %9 : i1 to i32
    %c0_i32_9 = arith.constant 0 : i32
    %11 = arith.cmpi ne, %10, %c0_i32_9 : i32
    scf.if %11 {
      %c0_10 = arith.constant 0 : index
      %c0_11 = arith.constant 0 : index
      %12 = vector.load %arg5[%c0_10, %c0_11] : memref<16x96xf32, #tpu.memory_space<vmem>>, vector<16x96xf32>
      %c0_12 = arith.constant 0 : index
      %c0_13 = arith.constant 0 : index
      %13 = vector.load %arg4[%c0_12, %c0_13] : memref<16x96xf32, #tpu.memory_space<vmem>>, vector<16x96xf32>
      tpu.vector_store %arg4[%c0_12, %c0_13], %12 {strides = array<i32>} : memref<16x96xf32, #tpu.memory_space<vmem>>, vector<16x96xf32>,
    } else {
    }
    return
  }
  func.func @transform_0(%arg0: i32, %arg1: i32) -> (i32, i32) {
    %c0_i32 = arith.constant 0 : i32
    return %arg0, %arg1 : i32, i32
  }
  func.func @transform_1(%arg0: i32, %arg1: i32) -> (i32, i32) {
    %c0_i32 = arith.constant 0 : i32
    %c0_i32_0 = arith.constant 0 : i32
    return %arg1, %c0_i32 : i32, i32
  }
  func.func @transform_2(%arg0: i32, %arg1: i32) -> (i32, i32) {
    %c0_i32 = arith.constant 0 : i32
    %c0_i32_0 = arith.constant 0 : i32
    return %arg0, %c0_i32 : i32, i32
  }
}

</mosaic_0001>

<llo_original>
// kernel: tpu_custom_call.1
$region0: #{tpu_custom_call.1}
  #allocation0 [shape = 'u32[]', space=smem, size = 0x4, offset = 0x4, fixed_abs, tag = 'smem constant byte address 0x4 - core index']
  #allocation1 [shape = 'u32[144,128]{1,0:T(1,128)}', space=vmem, size = 0x12000, scoped, tag = 'internal scratch']
  #allocation2 [shape = 'f32[16,96]{1,0:T(8,128)}', space=vmem, size = 0x2000, scoped, tag = 'scratch operand']
  %s0 = inlined_call_operand.hbm [shape: f32[16,32], index: 0, kind: input, shape index: {}]
  %s1 = inlined_call_operand.hbm [shape: f32[32,96], index: 1, kind: input, shape index: {}]
  %s2 = inlined_call_operand.hbm [shape: f32[16,96], index: 2, kind: output, shape index: {}]
  %s3 = sld [smem:[#allocation0]]
  $region34: #{tpu_custom_call.1} parent=0
    _
  %s5 = ssub.s32 1, %s3
  %s6 = scalar_select 0, %s5, %s3
  $region1: #{tpu_custom_call.1} parent=0
    #allocation3 [shape = 'u8[8192]{0}', space=vmem, size = 0x2000, scoped, tag = 'input window, operand 0, single buffered']
    #allocation4 [shape = 's32[1]{0}', space=sflag, size = 0x4, scoped, tag = 'scoped memory for tpu_custom_call.1']
    #allocation5 [shape = 's32[1]{0}', space=sflag, size = 0x4, scoped, tag = 'scoped memory for tpu_custom_call.1']
    #allocation6 [shape = 'u8[16384]{0}', space=vmem, size = 0x4000, scoped, tag = 'input window, operand 1, single buffered']
    #allocation7 [shape = 's32[1]{0}', space=sflag, size = 0x4, scoped, tag = 'scoped memory for tpu_custom_call.1']
    #allocation8 [shape = 'u8[8192]{0}', space=vmem, size = 0x2000, scoped, tag = 'output window, operand 0, single buffered']
    %7 = vsyncpa [#allocation4], 0
    %8 = vsyncpa [#allocation7], 0
    %9 = vsyncpa [#allocation5], 0
    // Predicated region
    $region2: #{tpu_custom_call.1} parent=1 // pred_check
      _
    $region3: #{tpu_custom_call.1} parent=1 // pred_check_branch
      %11 = sbr.rel (0) target = $region5
    $region4: #{tpu_custom_call.1} parent=1 // pred_region
      %s13 = ssub.s32 256, 256
      %14 = vsyncadd [#allocation4], %s13
      %s15 = sshll.u32 [#allocation3], 4
      %s16 = int_to_ptr.vmem [resolvable:$true] %s15
      %21 = dma.hbm_to_vmem [thread:$0]  %s0, 256, %s16, [#allocation4], 128, 128, 8
    $region5: #{tpu_custom_call.1} parent=1 // pred_fallthru
      _
    // Predicated region
    $region6: #{tpu_custom_call.1} parent=1 // pred_check
      _
    $region7: #{tpu_custom_call.1} parent=1 // pred_check_branch
      %23 = sbr.rel (0) target = $region9
    $region8: #{tpu_custom_call.1} parent=1 // pred_region
      %s25 = ssub.s32 512, 512
      %26 = vsyncadd [#allocation7], %s25
      %s27 = sshll.u32 [#allocation6], 4
      %s28 = int_to_ptr.vmem [resolvable:$true] %s27
      %33 = dma.hbm_to_vmem [thread:$0]  %s1, 512, %s28, [#allocation7], 128, 128, 8
    $region9: #{tpu_custom_call.1} parent=1 // pred_fallthru
      _
    // Predicated region
    $region10: #{tpu_custom_call.1} parent=1 // pred_check
      _
    $region11: #{tpu_custom_call.1} parent=1 // pred_check_branch
      %35 = sbr.rel (0) target = $region13
    $region12: #{tpu_custom_call.1} parent=1 // pred_region
      %36 = dma.done [#allocation4], 256
    $region13: #{tpu_custom_call.1} parent=1 // pred_fallthru
      _
    // Predicated region
    $region14: #{tpu_custom_call.1} parent=1 // pred_check
      _
    $region15: #{tpu_custom_call.1} parent=1 // pred_check_branch
      %38 = sbr.rel (0) target = $region17
    $region16: #{tpu_custom_call.1} parent=1 // pred_region
      %39 = dma.done [#allocation7], 512
    $region17: #{tpu_custom_call.1} parent=1 // pred_fallthru
      _
    %p40 = scmp.eq.s32.totalorder 0, 0
    // Predicated region
    $region18: #{tpu_custom_call.1} parent=1 // pred_check
      %p41 = pneg %p40
    $region19: #{tpu_custom_call.1} parent=1 // pred_check_branch
      %43 = sbr.rel (%p41) target = $region21
    $region20: #{tpu_custom_call.1} parent=1 // pred_region
      %vm44 = vcmask 785408
      %45 = vst.msk [vmem:[#allocation2] sm:$0xff] %vm44, 0.0
      %46 = vst.msk [vmem:[#allocation2 + $0x8] sm:$0xff] %vm44, 0.0
    $region21: #{tpu_custom_call.1} parent=1 // pred_fallthru
      _
    %v47 = vld [vmem:[#allocation2] sm:$0xff]
    %v48 = vld [vmem:[#allocation2 + $0x8] sm:$0xff]
    %v49 = vld [vmem:[#allocation3] sm:$0xff]
    %v50 = vld [vmem:[#allocation3 + $0x8] sm:$0xff]
    %v51 = vld [vmem:[#allocation6] sm:$0xff]
    %v52 = vld [vmem:[#allocation6 + $0x8] sm:$0xff]
    %v53 = vld [vmem:[#allocation6 + $0x10] sm:$0xff]
    %v54 = vld [vmem:[#allocation6 + $0x18] sm:$0xff]
    %vm55 = vcmask 261120
    %v57 = vsel %vm55, %v49, 0
    %v60 = vsel %vm55, %v50, 0
    %62 = vmatprep.subr.mxu0 0.0
    %63 = vmatpush1.msra.mxu0 0.0
    %64 = vmatprep.subr.mxu0 0.0
    %65 = vmatpush1.msra.mxu0 0.0
    %66 = vmatprep.subr.mxu0 0.0
    %67 = vmatpush1.msra.mxu0 0.0
    %68 = vmatprep.subr.mxu0 0.0
    %69 = vmatpush1.msra.mxu0 0.0
    %70 = vmatprep.subr.mxu0 0.0
    %71 = vmatpush1.msra.mxu0 0.0
    %72 = vmatprep.subr.mxu0 0.0
    %73 = vmatpush1.msra.mxu0 0.0
    %74 = vmatprep.subr.mxu0 0.0
    %75 = vmatpush1.msra.mxu0 0.0
    %76 = vmatprep.subr.mxu0 0.0
    %77 = vmatpush1.msra.mxu0 0.0
    %78 = vmatprep.subr.mxu0 0.0
    %79 = vmatpush1.msra.mxu0 0.0
    %80 = vmatprep.subr.mxu0 0.0
    %81 = vmatpush1.msra.mxu0 0.0
    %82 = vmatprep.subr.mxu0 0.0
    %83 = vmatpush1.msra.mxu0 0.0
    %84 = vmatprep.subr.mxu0 0.0
    %85 = vmatpush1.msra.mxu0 0.0
    %86 = vmatprep.subr.mxu0 0.0
    %87 = vmatpush1.msra.mxu0 %v54
    %88 = vmatprep.subr.mxu0 0.0
    %89 = vmatpush1.msra.mxu0 %v53
    %90 = vmatprep.subr.mxu0 0.0
    %91 = vmatpush1.msra.mxu0 %v52
    %92 = vmatprep.subr.mxu0 0.0
    %93 = vmatpush1.msra.mxu0 %v51
    %94 = vmatprep.subr.mxu0 0.0
    %95 = vmatpush2.msra.mxu0 0.0
    %96 = vmatprep.subr.mxu0 0.0
    %97 = vmatpush2.msra.mxu0 0.0
    %98 = vmatprep.subr.mxu0 0.0
    %99 = vmatpush2.msra.mxu0 0.0
    %100 = vmatprep.subr.mxu0 0.0
    %101 = vmatpush2.msra.mxu0 0.0
    %102 = vmatprep.subr.mxu0 0.0
    %103 = vmatpush2.msra.mxu0 0.0
    %104 = vmatprep.subr.mxu0 0.0
    %105 = vmatpush2.msra.mxu0 0.0
    %106 = vmatprep.subr.mxu0 0.0
    %107 = vmatpush2.msra.mxu0 0.0
    %108 = vmatprep.subr.mxu0 0.0
    %109 = vmatpush2.msra.mxu0 0.0
    %110 = vmatprep.subr.mxu0 0.0
    %111 = vmatpush2.msra.mxu0 0.0
    %112 = vmatprep.subr.mxu0 0.0
    %113 = vmatpush2.msra.mxu0 0.0
    %114 = vmatprep.subr.mxu0 0.0
    %115 = vmatpush2.msra.mxu0 0.0
    %116 = vmatprep.subr.mxu0 0.0
    %117 = vmatpush2.msra.mxu0 0.0
    %118 = vmatprep.subr.mxu0 0.0
    %119 = vmatpush2.msra.mxu0 0.0
    %120 = vmatprep.subr.mxu0 0.0
    %121 = vmatpush2.msra.mxu0 0.0
    %122 = vmatprep.subr.mxu0 0.0
    %123 = vmatpush2.msra.mxu0 0.0
    %124 = vmatprep.subr.mxu0 0.0
    %125 = vmatpush2.msra.mxu0 0.0
    %126 = vmatprep.mubr.f32.mxu0 0.0
    %127 = vmatmul.mubr.f32.gmra.mxu0 %v57
    %v128 = vpop.f32.mrf.mxu0
    %v129 = vadd.f32 0.0, %v128
    %v130 = vpop.f32.mrf.mxu0
    %131 = vmatprep.mubr.f32.mxu0 0.0
    %132 = vmatmul.mubr.f32.gmra.mxu0 %v60
    %v133 = vpop.f32.mrf.mxu0
    %v134 = vadd.f32 0.0, %v133
    %v135 = vpop.f32.mrf.mxu0
    %136 = vdwg.mxu0
    %v137 = vadd.f32 %v47, %v129
    %v138 = vadd.f32 %v48, %v134
    %vm139 = vcmask 785408
    %140 = vst.msk [vmem:[#allocation2] sm:$0xff] %vm139, %v137
    %141 = vst.msk [vmem:[#allocation2 + $0x8] sm:$0xff] %vm139, %v138
    // Predicated region
    $region22: #{tpu_custom_call.1} parent=1 // pred_check
      %p142 = pneg %p40
    $region23: #{tpu_custom_call.1} parent=1 // pred_check_branch
      %144 = sbr.rel (%p142) target = $region25
    $region24: #{tpu_custom_call.1} parent=1 // pred_region
      %v145 = vld [vmem:[#allocation2] sm:$0xff]
      %v146 = vld [vmem:[#allocation2 + $0x8] sm:$0xff]
      %147 = vst.msk [vmem:[#allocation8] sm:$0xff] %vm139, %v145
      %148 = vst.msk [vmem:[#allocation8 + $0x8] sm:$0xff] %vm139, %v146
    $region25: #{tpu_custom_call.1} parent=1 // pred_fallthru
      _
    // Predicated region
    $region26: #{tpu_custom_call.1} parent=1 // pred_check
      _
    $region27: #{tpu_custom_call.1} parent=1 // pred_check_branch
      %150 = sbr.rel (0) target = $region29
    $region28: #{tpu_custom_call.1} parent=1 // pred_region
      %s152 = ssub.s32 256, 256
      %153 = vsyncadd [#allocation5], %s152
      %s154 = sshll.u32 [#allocation8], 4
      %s155 = int_to_ptr.vmem [resolvable:$true] %s154
      %160 = dma.vmem_to_hbm [thread:$0]  %s155, 256, %s2, [#allocation5], 128, 128, 8
    $region29: #{tpu_custom_call.1} parent=1 // pred_fallthru
      _
    // Predicated region
    $region30: #{tpu_custom_call.1} parent=1 // pred_check
      _
    $region31: #{tpu_custom_call.1} parent=1 // pred_check_branch
      %162 = sbr.rel (0) target = $region33
    $region32: #{tpu_custom_call.1} parent=1 // pred_region
      %163 = dma.done [#allocation5], 256
    $region33: #{tpu_custom_call.1} parent=1 // pred_fallthru
      _
    %164 = vsyncpa [#allocation4], 1
    %165 = vsyncpa [#allocation7], 1
    %166 = vsyncpa [#allocation5], 1

</llo_original>
